<compile_context>
chip_gen: v7x
topology: tpu7x:2x2x1
jax: 0.10.0
libtpu: 0.0.40
codegen_flags: <defaults>
</compile_context>

<pallas_src>
import jax
import jax.numpy as jnp
from jax.experimental import pallas as pl
from jax.experimental.pallas import tpu as pltpu

BN_EPS = 1e-5
BN_SCALE = 1.0 / (1.0 + BN_EPS) ** 0.5  # eval-mode BN: (x - 0) / sqrt(1 + eps)


def _nonlocal_fused_kernel(x_ref, wcat_ref, bcat_ref, ww_ref, bw_ref, o_ref):
    # x_ref:    (1, C, N)   channels-first flattened spatial slab (N on lanes)
    # wcat_ref: (IC+1, C)   rows [0:IC] = phi conv weight, row IC = cluster @ wg
    # bcat_ref: (IC+1, 1)   matching biases (row IC = cluster @ bg)
    # ww_ref:   (C, IC)     W conv weight with eval-mode BN folded in
    # bw_ref:   (C, 1)      W conv bias  with eval-mode BN folded in
    # o_ref:    (1, C, N)   z = W(y_view) + x
    n = x_ref.shape[2]
    ic = ww_ref.shape[1]
    m = n // ic  # wrapper guarantees ic | n

    x = x_ref[0]  # (C, N)

    # ---- stage 1: fused phi / cluster projection (one MXU push over x) ----
    proj = jnp.dot(wcat_ref[...], x, preferred_element_type=jnp.float32) + bcat_ref[...]
    phi = proj[:ic, :]           # (IC, N)  == phi_x^T of the PyTorch code
    c_row = proj[ic:ic + 1, :]   # (1, N)   == c^T (g conv folded with the cluster)
    # (global_relation in the PyTorch forward is computed but never used -> omitted)

    # d[i] = sum_n phi[i, n] * c[n]
    d_col = jnp.sum(phi * c_row, axis=1, keepdims=True)       # (IC, 1)

    # y[n, i] = c[n] * d[i] / phi[n, i]; kept channels-first: y_cf[i, n] = y[n, i]
    inv_phi = pl.reciprocal(phi, approx=True)                 # EUP (see header note)
    y_cf = (c_row * d_col) * inv_phi                          # (IC, N)

    # ---- stage 2: W conv + folded BN + residual on the raw-reshaped y ----
    # y_view[i2, a*IC + b] = y_cf[b, i2*M + a].  For each phase b,
    #   Gb[c, a] = sum_i2 ww[c, i2] * y_cf[b, i2*M + a]
    # is the W-conv output at lanes m = a*IC + b; scatter it to those lanes with an
    # exact one-hot selection matmul E_b[a, m] = [m == a*IC + b].
    ww = ww_ref[...]                                          # (C, IC)
    a_idx = jax.lax.broadcasted_iota(jnp.int32, (m, n), 0)
    m_idx = jax.lax.broadcasted_iota(jnp.int32, (m, n), 1)
    tgt = a_idx * ic

    acc = x + bw_ref[...]                                     # residual + folded BN bias
    for b in range(ic):                                       # static unroll (IC small)
        gb = ww[:, 0:1] * y_cf[b:b + 1, 0:m]                  # (C, M)
        for i2 in range(1, ic):
            gb = gb + ww[:, i2:i2 + 1] * y_cf[b:b + 1, i2 * m:(i2 + 1) * m]
        e_b = (m_idx == tgt + b).astype(jnp.float32)          # (M, N) exact one-hot
        acc = acc + jnp.dot(gb, e_b, preferred_element_type=jnp.float32)

    o_ref[0] = acc


def non_local_block_forward(x, params):
    """x: (B, C, H, W) float32, NCHW -- same convention as the PyTorch module."""
    B, C, H, W = x.shape
    N = H * W
    wg, bg = params["wg"], params["bg"]          # (IC, C), (IC,)
    wphi, bphi = params["wphi"], params["bphi"]  # (IC, C), (IC,)
    clu = params["cluster"]                      # (1, IC)
    ww, bw = params["ww"], params["bw"]          # (C, IC), (C,)
    IC = wphi.shape[0]

    if N % IC != 0:
        # TODO(synk): general H*W not divisible by inter_channels needs a per-row
        # phase-offset shuffle for the raw view; not implemented.
        raise NotImplementedError("H*W must be divisible by inter_channels")

    # Algebraic elimination of the g conv: c = x^T (wg^T cluster^T) + cluster . bg
    v_row = clu @ wg                              # (1, C)
    c0 = clu @ bg.reshape(IC, 1)                  # (1, 1)
    # Single fused projection: rows [0:IC] -> phi conv, row IC -> cluster direction.
    wcat = jnp.concatenate([wphi, v_row], axis=0)               # (IC+1, C)
    bcat = jnp.concatenate([bphi.reshape(IC, 1), c0], axis=0)   # (IC+1, 1)
    # Fold eval-mode BatchNorm into the W conv.
    ww_bn = ww * BN_SCALE                         # (C, IC)
    bw_bn = (bw * BN_SCALE).reshape(C, 1)         # (C, 1)

    x_cf = x.reshape(B, C, N)                     # free row-major reshape

    out = pl.pallas_call(
        _nonlocal_fused_kernel,
        out_shape=jax.ShapeDtypeStruct((B, C, N), jnp.float32),
        grid=(B,),
        in_specs=[
            pl.BlockSpec((1, C, N), lambda b: (b, 0, 0)),
            pl.BlockSpec((IC + 1, C), lambda b: (0, 0)),
            pl.BlockSpec((IC + 1, 1), lambda b: (0, 0)),
            pl.BlockSpec((C, IC), lambda b: (0, 0)),
            pl.BlockSpec((C, 1), lambda b: (0, 0)),
        ],
        out_specs=pl.BlockSpec((1, C, N), lambda b: (b, 0, 0)),
        compiler_params=pltpu.CompilerParams(dimension_semantics=("parallel",)),
    )(x_cf, wcat, bcat, ww_bn, bw_bn)

    return out.reshape(B, C, H, W)


def init_params(key, in_channels, inter_channels):
    """Deterministic synthetic init matching the parameter shapes of the module."""
    C, IC = in_channels, inter_channels
    kc, kg1, kg2, kp1, kp2, kw1, kw2 = jax.random.split(key, 7)

    # global_cluster: (1, IC), kaiming-normal-ish (fan_out)
    cluster = jax.random.normal(kc, (1, IC), jnp.float32) * jnp.sqrt(2.0 / IC)

    def conv_init(kw_, kb_, cout, cin):
        # 1x1 conv -> (out, in) weight + (out,) bias, PyTorch-style uniform bounds
        bound = 1.0 / jnp.sqrt(jnp.float32(cin))
        w = jax.random.uniform(kw_, (cout, cin), jnp.float32, -bound, bound)
        b = jax.random.uniform(kb_, (cout,), jnp.float32, -bound, bound)
        return w, b

    wg, bg = conv_init(kg1, kg2, IC, C)        # self.g
    wphi, bphi = conv_init(kp1, kp2, IC, C)    # self.phi
    ww, bw = conv_init(kw1, kw2, C, IC)        # self.W[0]
    return dict(wg=wg, bg=bg, wphi=wphi, bphi=bphi, cluster=cluster, ww=ww, bw=bw)


if __name__ == "__main__":
    B, C, H, W = 2, 4, 16, 16            # dimension=2 instance of _NonLocalBlockND
    IC = C // 2                          # inter_channels default

    key = jax.random.PRNGKey(0)
    kx, kp = jax.random.split(key)
    x = jax.random.normal(kx, (B, C, H, W), jnp.float32)
    params = init_params(kp, C, IC)

    z = non_local_block_forward(x, params)
    jax.block_until_ready(z)
    assert z.shape == (B, C, H, W) and z.dtype == jnp.float32
    print("KERNEL_OK")
</pallas_src>

<mosaic_0001>
module attributes {stable_mosaic.version = 11 : i64} {
  func.func @_nonlocal_fused_kernel(%arg0: i32, %arg1: memref<1x4x256xf32, #tpu.memory_space<vmem>>, %arg2: memref<3x4xf32, #tpu.memory_space<vmem>>, %arg3: memref<3x1xf32, #tpu.memory_space<vmem>>, %arg4: memref<4x2xf32, #tpu.memory_space<vmem>>, %arg5: memref<4x1xf32, #tpu.memory_space<vmem>>, %arg6: memref<1x4x256xf32, #tpu.memory_space<vmem>>) attributes {dimension_semantics = [#tpu.dimension_semantics<parallel>], iteration_bounds = array<i64: 2>, scalar_prefetch = 0 : i64, scratch_operands = 0 : i64, tpu.core_type = #tpu.core_type<tc>, window_params = [{transform_indices = @transform_0, window_bounds = array<i64: 1, 4, 256>}, {pipeline_mode = #tpu.pipeline_mode<synchronous>, transform_indices = @transform_1, window_bounds = array<i64: 3, 4>}, {pipeline_mode = #tpu.pipeline_mode<synchronous>, transform_indices = @transform_2, window_bounds = array<i64: 3, 1>}, {pipeline_mode = #tpu.pipeline_mode<synchronous>, transform_indices = @transform_3, window_bounds = array<i64: 4, 2>}, {pipeline_mode = #tpu.pipeline_mode<synchronous>, transform_indices = @transform_4, window_bounds = array<i64: 4, 1>}, {transform_indices = @transform_5, window_bounds = array<i64: 1, 4, 256>}]} {
    %c0 = arith.constant 0 : index
    %c0_0 = arith.constant 0 : index
    %c0_1 = arith.constant 0 : index
    %0 = vector.load %arg1[%c0, %c0_0, %c0_1] : memref<1x4x256xf32, #tpu.memory_space<vmem>>, vector<1x4x256xf32>
    %1 = vector.shape_cast %0 : vector<1x4x256xf32> to vector<4x256xf32>
    %c0_2 = arith.constant 0 : index
    %c0_3 = arith.constant 0 : index
    %2 = vector.load %arg2[%c0_2, %c0_3] : memref<3x4xf32, #tpu.memory_space<vmem>>, vector<3x4xf32>
    %cst = arith.constant dense<0.000000e+00> : vector<3x256xf32>
    %3 = tpu.matmul %2, %1, %cst {dimension_numbers = #tpu.dot_dimension_numbers<[1], [0], [0], [1], [0, 0, 1, 1], [], []>} : vector<3x4xf32>, vector<4x256xf32>, vector<3x256xf32> -> vector<3x256xf32>
    %c0_4 = arith.constant 0 : index
    %c0_5 = arith.constant 0 : index
    %4 = vector.load %arg3[%c0_4, %c0_5] : memref<3x1xf32, #tpu.memory_space<vmem>>, vector<3x1xf32>
    %5 = vector.broadcast %4 : vector<3x1xf32> to vector<3x256xf32>
    %6 = arith.addf %3, %5 : vector<3x256xf32>
    %7 = vector.extract_strided_slice %6 {offsets = [0, 0], sizes = [2, 256], strides = [1, 1]} : vector<3x256xf32> to vector<2x256xf32>
    %8 = vector.extract_strided_slice %6 {offsets = [2, 0], sizes = [1, 256], strides = [1, 1]} : vector<3x256xf32> to vector<1x256xf32>
    %9 = vector.broadcast %8 : vector<1x256xf32> to vector<2x256xf32>
    %10 = arith.mulf %7, %9 : vector<2x256xf32>
    %cst_6 = arith.constant dense<0.000000e+00> : vector<2xf32>
    %11 = vector.multi_reduction <add>, %10, %cst_6 [1] : vector<2x256xf32> to vector<2xf32>
    %12 = vector.shape_cast %11 : vector<2xf32> to vector<2x1xf32>
    %13 = tpu.reciprocal %7 {approx = true} : vector<2x256xf32> -> vector<2x256xf32>
    %14 = vector.broadcast %8 : vector<1x256xf32> to vector<2x256xf32>
    %15 = vector.broadcast %12 : vector<2x1xf32> to vector<2x256xf32>
    %16 = arith.mulf %14, %15 : vector<2x256xf32>
    %17 = arith.mulf %16, %13 : vector<2x256xf32>
    %c0_7 = arith.constant 0 : index
    %c0_8 = arith.constant 0 : index
    %18 = vector.load %arg4[%c0_7, %c0_8] : memref<4x2xf32, #tpu.memory_space<vmem>>, vector<4x2xf32>
    %19 = tpu.iota {dimensions = array<i32: 0>} : vector<128x256xi32>
    %20 = tpu.iota {dimensions = array<i32: 1>} : vector<128x256xi32>
    %c2_i32 = arith.constant 2 : i32
    %21 = vector.broadcast %c2_i32 : i32 to vector<128x256xi32>
    %22 = arith.muli %19, %21 : vector<128x256xi32>
    %c0_9 = arith.constant 0 : index
    %c0_10 = arith.constant 0 : index
    %23 = vector.load %arg5[%c0_9, %c0_10] : memref<4x1xf32, #tpu.memory_space<vmem>>, vector<4x1xf32>
    %24 = vector.broadcast %23 : vector<4x1xf32> to vector<4x256xf32>
    %25 = arith.addf %1, %24 : vector<4x256xf32>
    %26 = vector.extract_strided_slice %18 {offsets = [0, 0], sizes = [4, 1], strides = [1, 1]} : vector<4x2xf32> to vector<4x1xf32>
    %27 = vector.extract_strided_slice %17 {offsets = [0, 0], sizes = [1, 128], strides = [1, 1]} : vector<2x256xf32> to vector<1x128xf32>
    %28 = vector.broadcast %26 : vector<4x1xf32> to vector<4x128xf32>
    %29 = vector.broadcast %27 : vector<1x128xf32> to vector<4x128xf32>
    %30 = arith.mulf %28, %29 : vector<4x128xf32>
    %31 = vector.extract_strided_slice %18 {offsets = [0, 1], sizes = [4, 1], strides = [1, 1]} : vector<4x2xf32> to vector<4x1xf32>
    %32 = vector.extract_strided_slice %17 {offsets = [0, 128], sizes = [1, 128], strides = [1, 1]} : vector<2x256xf32> to vector<1x128xf32>
    %33 = vector.broadcast %31 : vector<4x1xf32> to vector<4x128xf32>
    %34 = vector.broadcast %32 : vector<1x128xf32> to vector<4x128xf32>
    %35 = arith.mulf %33, %34 : vector<4x128xf32>
    %36 = arith.addf %30, %35 : vector<4x128xf32>
    %c0_i32 = arith.constant 0 : i32
    %37 = vector.broadcast %c0_i32 : i32 to vector<128x256xi32>
    %38 = arith.addi %22, %37 : vector<128x256xi32>
    %39 = arith.cmpi eq, %20, %38 : vector<128x256xi32>
    %40 = arith.extui %39 : vector<128x256xi1> to vector<128x256xi32>
    %41 = arith.sitofp %40 : vector<128x256xi32> to vector<128x256xf32>
    %cst_11 = arith.constant dense<0.000000e+00> : vector<4x256xf32>
    %42 = tpu.matmul %36, %41, %cst_11 {dimension_numbers = #tpu.dot_dimension_numbers<[1], [0], [0], [1], [0, 0, 1, 1], [], []>} : vector<4x128xf32>, vector<128x256xf32>, vector<4x256xf32> -> vector<4x256xf32>
    %43 = arith.addf %25, %42 : vector<4x256xf32>
    %44 = vector.extract_strided_slice %18 {offsets = [0, 0], sizes = [4, 1], strides = [1, 1]} : vector<4x2xf32> to vector<4x1xf32>
    %45 = vector.extract_strided_slice %17 {offsets = [1, 0], sizes = [1, 128], strides = [1, 1]} : vector<2x256xf32> to vector<1x128xf32>
    %46 = vector.broadcast %44 : vector<4x1xf32> to vector<4x128xf32>
    %47 = vector.broadcast %45 : vector<1x128xf32> to vector<4x128xf32>
    %48 = arith.mulf %46, %47 : vector<4x128xf32>
    %49 = vector.extract_strided_slice %18 {offsets = [0, 1], sizes = [4, 1], strides = [1, 1]} : vector<4x2xf32> to vector<4x1xf32>
    %50 = vector.extract_strided_slice %17 {offsets = [1, 128], sizes = [1, 128], strides = [1, 1]} : vector<2x256xf32> to vector<1x128xf32>
    %51 = vector.broadcast %49 : vector<4x1xf32> to vector<4x128xf32>
    %52 = vector.broadcast %50 : vector<1x128xf32> to vector<4x128xf32>
    %53 = arith.mulf %51, %52 : vector<4x128xf32>
    %54 = arith.addf %48, %53 : vector<4x128xf32>
    %c1_i32 = arith.constant 1 : i32
    %55 = vector.broadcast %c1_i32 : i32 to vector<128x256xi32>
    %56 = arith.addi %22, %55 : vector<128x256xi32>
    %57 = arith.cmpi eq, %20, %56 : vector<128x256xi32>
    %58 = arith.extui %57 : vector<128x256xi1> to vector<128x256xi32>
    %59 = arith.sitofp %58 : vector<128x256xi32> to vector<128x256xf32>
    %cst_12 = arith.constant dense<0.000000e+00> : vector<4x256xf32>
    %60 = tpu.matmul %54, %59, %cst_12 {dimension_numbers = #tpu.dot_dimension_numbers<[1], [0], [0], [1], [0, 0, 1, 1], [], []>} : vector<4x128xf32>, vector<128x256xf32>, vector<4x256xf32> -> vector<4x256xf32>
    %61 = arith.addf %43, %60 : vector<4x256xf32>
    %c0_13 = arith.constant 0 : index
    %c0_14 = arith.constant 0 : index
    %c0_15 = arith.constant 0 : index
    %62 = vector.load %arg6[%c0_13, %c0_14, %c0_15] : memref<1x4x256xf32, #tpu.memory_space<vmem>>, vector<1x4x256xf32>
    %63 = vector.shape_cast %62 : vector<1x4x256xf32> to vector<4x256xf32>
    %64 = vector.shape_cast %61 : vector<4x256xf32> to vector<1x4x256xf32>
    tpu.vector_store %arg6[%c0_13, %c0_14, %c0_15], %64 {strides = array<i32>} : memref<1x4x256xf32, #tpu.memory_space<vmem>>, vector<1x4x256xf32>,
    return
  }
  func.func @transform_0(%arg0: i32) -> (i32, i32, i32) {
    %c0_i32 = arith.constant 0 : i32
    %c0_i32_0 = arith.constant 0 : i32
    %c0_i32_1 = arith.constant 0 : i32
    return %arg0, %c0_i32, %c0_i32_0 : i32, i32, i32
  }
  func.func @transform_1(%arg0: i32) -> (i32, i32) {
    %c0_i32 = arith.constant 0 : i32
    %c0_i32_0 = arith.constant 0 : i32
    %c0_i32_1 = arith.constant 0 : i32
    return %c0_i32, %c0_i32_0 : i32, i32
  }
  func.func @transform_2(%arg0: i32) -> (i32, i32) {
    %c0_i32 = arith.constant 0 : i32
    %c0_i32_0 = arith.constant 0 : i32
    %c0_i32_1 = arith.constant 0 : i32
    return %c0_i32, %c0_i32_0 : i32, i32
  }
  func.func @transform_3(%arg0: i32) -> (i32, i32) {
    %c0_i32 = arith.constant 0 : i32
    %c0_i32_0 = arith.constant 0 : i32
    %c0_i32_1 = arith.constant 0 : i32
    return %c0_i32, %c0_i32_0 : i32, i32
  }
  func.func @transform_4(%arg0: i32) -> (i32, i32) {
    %c0_i32 = arith.constant 0 : i32
    %c0_i32_0 = arith.constant 0 : i32
    %c0_i32_1 = arith.constant 0 : i32
    return %c0_i32, %c0_i32_0 : i32, i32
  }
  func.func @transform_5(%arg0: i32) -> (i32, i32, i32) {
    %c0_i32 = arith.constant 0 : i32
    %c0_i32_0 = arith.constant 0 : i32
    %c0_i32_1 = arith.constant 0 : i32
    return %arg0, %c0_i32, %c0_i32_0 : i32, i32, i32
  }
}

</mosaic_0001>

<llo_original>
// kernel: tpu_custom_call.1
$region0: #{tpu_custom_call.1}
  #allocation0 [shape = 'u32[]', space=smem, size = 0x4, offset = 0x4, fixed_abs, tag = 'smem constant byte address 0x4 - core index']
  #allocation1 [shape = 'u32[144,128]{1,0:T(1,128)}', space=vmem, size = 0x12000, scoped, tag = 'internal scratch']
  %s0 = inlined_call_operand.hbm [shape: f32[2,4,256], index: 0, kind: input, shape index: {}]
  %s1 = inlined_call_operand.vmem [shape: f32[3,4], index: 1, kind: input, shape index: {}]
  %s2 = inlined_call_operand.vmem [shape: f32[3,1], index: 2, kind: input, shape index: {}]
  %s3 = inlined_call_operand.vmem [shape: f32[4,2], index: 3, kind: input, shape index: {}]
  %s4 = inlined_call_operand.vmem [shape: f32[4,1], index: 4, kind: input, shape index: {}]
  %s5 = inlined_call_operand.hbm [shape: f32[2,4,256], index: 5, kind: output, shape index: {}]
  %s6 = sld [smem:[#allocation0]]
  $region57: #{tpu_custom_call.1} parent=0
    _
  %s8 = ssub.s32 1, %s6
  %s9 = scalar_select 0, %s8, %s6
  $region1: #{tpu_custom_call.1} parent=0
    #allocation2 [shape = 'u8[8192]{0}', space=vmem, size = 0x2000, scoped, tag = 'input window, operand 0']
    #allocation3 [shape = 's32[2]{0}', space=sflag, size = 0x8, scoped, tag = 'scoped memory for tpu_custom_call.1']
    #allocation4 [shape = 's32[2]{0}', space=sflag, size = 0x8, scoped, tag = 'scoped memory for tpu_custom_call.1']
    #allocation5 [shape = 'u8[8192]{0}', space=vmem, size = 0x2000, scoped, tag = 'output window, operand 0']
    %10 = vsyncpa [#allocation3], 0
    %s11 = scalar_lea.sflag [#allocation3], 1
    %12 = vsyncpa %s11, 0
    %13 = vsyncpa [#allocation4], 0
    %s14 = scalar_lea.sflag [#allocation4], 1
    %15 = vsyncpa %s14, 0
    loop: start=0, step=1, limit=4
    $region2: #{tpu_custom_call.1} parent=1 // loop_pre_header
      _
    $region3: #{tpu_custom_call.1} parent=1 // loop_header
      %s17 = sphi 0, %s21
      %p18 = scmp.ge.s32.totalorder %s17, 4
      %s27 = sphi 0, %s29
      %s30 = sphi 0, %s27
      %s31 = sphi 0, %s30
      %s47 = sphi 0, %s31
      %s51 = sphi 0, %s51
      %s53 = sphi 0, %s51
      %s54 = sphi 0, %s53
      %s68 = sphi 0, %s54
      %s72 = sphi 0, %s72
      %s74 = sphi 0, %s72
      %s75 = sphi 0, %s74
      %s89 = sphi 0, %s75
      %s93 = sphi 0, %s93
      %s95 = sphi 0, %s93
      %s96 = sphi 0, %s95
      %s110 = sphi 0, %s96
      %s114 = sphi 0, %s114
      %s116 = sphi 0, %s114
      %s117 = sphi 0, %s116
      %s131 = sphi 0, %s117
      %s137 = sphi 0, %s139
      %s140 = sphi 0, %s137
      %s141 = sphi 0, %s140
      %s157 = sphi 0, %s141
    $region4: #{tpu_custom_call.1} parent=1 // loop_header_branch
      %20 = sbr.rel (%p18) target = $region8
    $region5: #{tpu_custom_call.1} parent=1 // loop_body
      %s22 = ssub.s32 %s17, 1
      %s23 = ssub.s32 %s17, 2
      %s24 = sadd.s32 %s17, 1
      %s25 = ssub.s32 %s17, %s24
      %p26 = scmp.eq.s32.totalorder %s25, 0
      %s28 = sadd.s32 %s27, 1
      %s29 = scalar_select %p26, %s27, %s28
      %p32 = pneg %p26
      %p33 = scmp.eq.s32.totalorder %s17, 1
      %p34 = por %p32, %p33
      %p35 = scmp.ne.s32.totalorder %s27, %s30
      %p36 = scmp.eq.s32.totalorder %s17, 0
      %p37 = por %p35, %p36
      %p38 = scmp.ne.s32.totalorder %s27, %s30
      %p39 = scmp.eq.s32.totalorder %s22, 1
      %p40 = por %p38, %p39
      %p41 = scmp.ne.s32.totalorder %s30, %s31
      %p42 = scmp.eq.s32.totalorder %s22, 0
      %p43 = por %p41, %p42
      %p44 = scmp.ne.s32.totalorder %s30, %s31
      %p45 = scmp.eq.s32.totalorder %s23, 1
      %p46 = por %p44, %p45
      %p48 = scmp.ne.s32.totalorder %s31, %s47
      %p49 = scmp.eq.s32.totalorder %s23, 0
      %p50 = por %p48, %p49
      %s52 = sadd.s32 %s51, 1
      %p55 = scmp.eq.s32.totalorder %s17, 1
      %p56 = scmp.ne.s32.totalorder %s51, %s53
      %p57 = scmp.eq.s32.totalorder %s17, 0
      %p58 = por %p56, %p57
      %p59 = scmp.ne.s32.totalorder %s51, %s53
      %p60 = scmp.eq.s32.totalorder %s22, 1
      %p61 = por %p59, %p60
      %p62 = scmp.ne.s32.totalorder %s53, %s54
      %p63 = scmp.eq.s32.totalorder %s22, 0
      %p64 = por %p62, %p63
      %p65 = scmp.ne.s32.totalorder %s53, %s54
      %p66 = scmp.eq.s32.totalorder %s23, 1
      %p67 = por %p65, %p66
      %p69 = scmp.ne.s32.totalorder %s54, %s68
      %p70 = scmp.eq.s32.totalorder %s23, 0
      %p71 = por %p69, %p70
      %s73 = sadd.s32 %s72, 1
      %p76 = scmp.eq.s32.totalorder %s17, 1
      %p77 = scmp.ne.s32.totalorder %s72, %s74
      %p78 = scmp.eq.s32.totalorder %s17, 0
      %p79 = por %p77, %p78
      %p80 = scmp.ne.s32.totalorder %s72, %s74
      %p81 = scmp.eq.s32.totalorder %s22, 1
      %p82 = por %p80, %p81
      %p83 = scmp.ne.s32.totalorder %s74, %s75
      %p84 = scmp.eq.s32.totalorder %s22, 0
      %p85 = por %p83, %p84
      %p86 = scmp.ne.s32.totalorder %s74, %s75
      %p87 = scmp.eq.s32.totalorder %s23, 1
      %p88 = por %p86, %p87
      %p90 = scmp.ne.s32.totalorder %s75, %s89
      %p91 = scmp.eq.s32.totalorder %s23, 0
      %p92 = por %p90, %p91
      %s94 = sadd.s32 %s93, 1
      %p97 = scmp.eq.s32.totalorder %s17, 1
      %p98 = scmp.ne.s32.totalorder %s93, %s95
      %p99 = scmp.eq.s32.totalorder %s17, 0
      %p100 = por %p98, %p99
      %p101 = scmp.ne.s32.totalorder %s93, %s95
      %p102 = scmp.eq.s32.totalorder %s22, 1
      %p103 = por %p101, %p102
      %p104 = scmp.ne.s32.totalorder %s95, %s96
      %p105 = scmp.eq.s32.totalorder %s22, 0
      %p106 = por %p104, %p105
      %p107 = scmp.ne.s32.totalorder %s95, %s96
      %p108 = scmp.eq.s32.totalorder %s23, 1
      %p109 = por %p107, %p108
      %p111 = scmp.ne.s32.totalorder %s96, %s110
      %p112 = scmp.eq.s32.totalorder %s23, 0
      %p113 = por %p111, %p112
      %s115 = sadd.s32 %s114, 1
      %p118 = scmp.eq.s32.totalorder %s17, 1
      %p119 = scmp.ne.s32.totalorder %s114, %s116
      %p120 = scmp.eq.s32.totalorder %s17, 0
      %p121 = por %p119, %p120
      %p122 = scmp.ne.s32.totalorder %s114, %s116
      %p123 = scmp.eq.s32.totalorder %s22, 1
      %p124 = por %p122, %p123
      %p125 = scmp.ne.s32.totalorder %s116, %s117
      %p126 = scmp.eq.s32.totalorder %s22, 0
      %p127 = por %p125, %p126
      %p128 = scmp.ne.s32.totalorder %s116, %s117
      %p129 = scmp.eq.s32.totalorder %s23, 1
      %p130 = por %p128, %p129
      %p132 = scmp.ne.s32.totalorder %s117, %s131
      %p133 = scmp.eq.s32.totalorder %s23, 0
      %p134 = por %p132, %p133
      %s135 = ssub.s32 %s17, %s24
      %p136 = scmp.eq.s32.totalorder %s135, 0
      %s138 = sadd.s32 %s137, 1
      %s139 = scalar_select %p136, %s137, %s138
      %p142 = pneg %p136
      %p143 = scmp.eq.s32.totalorder %s17, 1
      %p144 = por %p142, %p143
      %p145 = scmp.ne.s32.totalorder %s137, %s140
      %p146 = scmp.eq.s32.totalorder %s17, 0
      %p147 = por %p145, %p146
      %p148 = scmp.ne.s32.totalorder %s137, %s140
      %p149 = scmp.eq.s32.totalorder %s22, 1
      %p150 = por %p148, %p149
      %p151 = scmp.ne.s32.totalorder %s140, %s141
      %p152 = scmp.eq.s32.totalorder %s22, 0
      %p153 = por %p151, %p152
      %p154 = scmp.ne.s32.totalorder %s140, %s141
      %p155 = scmp.eq.s32.totalorder %s23, 1
      %p156 = por %p154, %p155
      %p158 = scmp.ne.s32.totalorder %s141, %s157
      %p159 = scmp.eq.s32.totalorder %s23, 0
      %p160 = por %p158, %p159
      %p161 = scmp.le.s32.totalorder 1, %s17
      %p162 = scmp.lt.s32.totalorder %s17, 3
      %p163 = pnand %p161, %p162
      %p164 = pneg %p163
      // Predicated region
      $region9: #{tpu_custom_call.1} parent=5 // pred_check
        _
      $region10: #{tpu_custom_call.1} parent=5 // pred_check_branch
        %166 = sbr.rel (%p163) target = $region12
      $region11: #{tpu_custom_call.1} parent=5 // pred_region
        %s167 = ssub.s32 %s17, 1
        // Predicated region
        $region13: #{tpu_custom_call.1} parent=11 // pred_check
          %p168 = pneg %p64
        $region14: #{tpu_custom_call.1} parent=11 // pred_check_branch
          %170 = sbr.rel (%p168) target = $region16
        $region15: #{tpu_custom_call.1} parent=11 // pred_region
          _
        $region16: #{tpu_custom_call.1} parent=11 // pred_fallthru
          _
        // Predicated region
        $region17: #{tpu_custom_call.1} parent=11 // pred_check
          %p171 = pneg %p85
        $region18: #{tpu_custom_call.1} parent=11 // pred_check_branch
          %173 = sbr.rel (%p171) target = $region20
        $region19: #{tpu_custom_call.1} parent=11 // pred_region
          _
        $region20: #{tpu_custom_call.1} parent=11 // pred_fallthru
          _
        // Predicated region
        $region21: #{tpu_custom_call.1} parent=11 // pred_check
          %p174 = pneg %p106
        $region22: #{tpu_custom_call.1} parent=11 // pred_check_branch
          %176 = sbr.rel (%p174) target = $region24
        $region23: #{tpu_custom_call.1} parent=11 // pred_region
          _
        $region24: #{tpu_custom_call.1} parent=11 // pred_fallthru
          _
        // Predicated region
        $region25: #{tpu_custom_call.1} parent=11 // pred_check
          %p177 = pneg %p127
        $region26: #{tpu_custom_call.1} parent=11 // pred_check_branch
          %179 = sbr.rel (%p177) target = $region28
        $region27: #{tpu_custom_call.1} parent=11 // pred_region
          _
        $region28: #{tpu_custom_call.1} parent=11 // pred_fallthru
          _
      $region12: #{tpu_custom_call.1} parent=5 // pred_fallthru
        _
      %p180 = scmp.lt.s32.totalorder %s17, 2
      // Predicated region
      $region29: #{tpu_custom_call.1} parent=5 // pred_check
        %p181 = pneg %p180
      $region30: #{tpu_custom_call.1} parent=5 // pred_check_branch
        %183 = sbr.rel (%p181) target = $region32
      $region31: #{tpu_custom_call.1} parent=5 // pred_region
        // Predicated region
        $region33: #{tpu_custom_call.1} parent=31 // pred_check
          %p184 = pneg %p37
        $region34: #{tpu_custom_call.1} parent=31 // pred_check_branch
          %186 = sbr.rel (%p184) target = $region36
        $region35: #{tpu_custom_call.1} parent=31 // pred_region
          %s187 = sand.u32 %s27, 1
          %s188 = scalar_lea.sflag [#allocation3], %s187
          %s189 = sand.u32 %s27, 1
          %s190 = smul.addr %s189, 8
          %s191 = scalar_lea.vmem [#allocation2], %s190
          %s193 = ssub.s32 128, 128
          %194 = vsyncadd %s188, %s193
          %s195 = smul.addr %s17, 2
          %s196 = smul.addr %s195, 64
          %s197 = scalar_lea.hbm %s0, %s196
          %s199 = sshll.u32 %s191, 4
          %s200 = int_to_ptr.vmem [resolvable:$true] %s199
          %202 = dma.hbm_to_vmem [thread:$0]  %s197, 128, %s200, %s188
        $region36: #{tpu_custom_call.1} parent=31 // pred_fallthru
          _
      $region32: #{tpu_custom_call.1} parent=5 // pred_fallthru
        _
      %p203 = scmp.le.s32.totalorder 1, %s17
      %p204 = scmp.lt.s32.totalorder %s17, 3
      %p205 = pnand %p203, %p204
      %p206 = pneg %p205
      // Predicated region
      $region37: #{tpu_custom_call.1} parent=5 // pred_check
        _
      $region38: #{tpu_custom_call.1} parent=5 // pred_check_branch
        %208 = sbr.rel (%p205) target = $region40
      $region39: #{tpu_custom_call.1} parent=5 // pred_region
        %s209 = ssub.s32 %s17, 1
        %s210 = sand.u32 %s30, 1
        %s211 = scalar_lea.sflag [#allocation3], %s210
        %s212 = sand.u32 %s30, 1
        %s213 = smul.addr %s212, 8
        %s214 = scalar_lea.vmem [#allocation2], %s213
        // Predicated region
        $region41: #{tpu_custom_call.1} parent=39 // pred_check
          %p215 = pneg %p43
        $region42: #{tpu_custom_call.1} parent=39 // pred_check_branch
          %217 = sbr.rel (%p215) target = $region44
        $region43: #{tpu_custom_call.1} parent=39 // pred_region
          %218 = dma.done %s211, 128
        $region44: #{tpu_custom_call.1} parent=39 // pred_fallthru
          _
        %s219 = sand.u32 %s30, 1
        %s220 = scalar_lea.sflag [#allocation3], %s219
        %s221 = sand.u32 %s30, 1
        %s222 = smul.addr %s221, 8
        %s223 = scalar_lea.vmem [#allocation2], %s222
        %p224 = pneg %p43
        %p225 = pneg %p40
        %p226 = pneg %p64
        %p227 = pneg %p61
        %p228 = pneg %p85
        %p229 = pneg %p82
        %p230 = pneg %p106
        %p231 = pneg %p103
        %p232 = pneg %p127
        %p233 = pneg %p124
        %p234 = pneg %p153
        %p235 = pneg %p150
        %s236 = sand.u32 %s140, 1
        %s237 = scalar_lea.sflag [#allocation4], %s236
        %s238 = sand.u32 %s140, 1
        %s239 = smul.addr %s238, 8
        %s240 = scalar_lea.vmem [#allocation5], %s239
        %v241 = vld [vmem:[%s214] sm:$0xff]
        %v242 = vld [vmem:[%s1] sm:$0x7]
        %v243 = vld [vmem:[%s2] sm:$0x7]
        %245 = vset.pattern.permute.xlu0 0
        %246 = vperm.xlu0 %245, %v243
        %v247 = vpop.permute.xlu0 %246
        %v250 = vcombine.high %v241, %v241
        %vm251 = vcmask 31744
        %v253 = vsel %vm251, %v242, 0
        %vm255 = vcmask 1043456
        %v256 = vsel %vm255, %v241, 0
        %v258 = vsel %vm255, %v250, 0
        %260 = vmatprep.subr.mxu0 %v258
        %261 = vmatpush1.msra.mxu0 %v256
        %262 = vmatprep.subr.mxu0 0.0
        %263 = vmatpush1.msra.mxu0 0.0
        %264 = vmatprep.subr.mxu0 0.0
        %265 = vmatpush1.msra.mxu0 0.0
        %266 = vmatprep.subr.mxu0 0.0
        %267 = vmatpush1.msra.mxu0 0.0
        %268 = vmatprep.subr.mxu0 0.0
        %269 = vmatpush1.msra.mxu0 0.0
        %270 = vmatprep.subr.mxu0 0.0
        %271 = vmatpush1.msra.mxu0 0.0
        %272 = vmatprep.subr.mxu0 0.0
        %273 = vmatpush1.msra.mxu0 0.0
        %274 = vmatprep.subr.mxu0 0.0
        %275 = vmatpush1.msra.mxu0 0.0
        %276 = vmatprep.subr.mxu0 0.0
        %277 = vmatpush1.msra.mxu0 0.0
        %278 = vmatprep.subr.mxu0 0.0
        %279 = vmatpush1.msra.mxu0 0.0
        %280 = vmatprep.subr.mxu0 0.0
        %281 = vmatpush1.msra.mxu0 0.0
        %282 = vmatprep.subr.mxu0 0.0
        %283 = vmatpush1.msra.mxu0 0.0
        %284 = vmatprep.subr.mxu0 0.0
        %285 = vmatpush1.msra.mxu0 0.0
        %286 = vmatprep.subr.mxu0 0.0
        %287 = vmatpush1.msra.mxu0 0.0
        %288 = vmatprep.subr.mxu0 0.0
        %289 = vmatpush1.msra.mxu0 0.0
        %290 = vmatprep.subr.mxu0 0.0
        %291 = vmatpush1.msra.mxu0 0.0
        %292 = vmatprep.subr.mxu0 0.0
        %293 = vmatpush1.msra.mxu0 0.0
        %294 = vmatprep.subr.mxu0 0.0
        %295 = vmatpush1.msra.mxu0 0.0
        %296 = vmatprep.subr.mxu0 0.0
        %297 = vmatpush1.msra.mxu0 0.0
        %298 = vmatprep.subr.mxu0 0.0
        %299 = vmatpush1.msra.mxu0 0.0
        %300 = vmatprep.subr.mxu0 0.0
        %301 = vmatpush1.msra.mxu0 0.0
        %302 = vmatprep.subr.mxu0 0.0
        %303 = vmatpush1.msra.mxu0 0.0
        %304 = vmatprep.subr.mxu0 0.0
        %305 = vmatpush1.msra.mxu0 0.0
        %306 = vmatprep.subr.mxu0 0.0
        %307 = vmatpush1.msra.mxu0 0.0
        %308 = vmatprep.subr.mxu0 0.0
        %309 = vmatpush1.msra.mxu0 0.0
        %310 = vmatprep.subr.mxu0 0.0
        %311 = vmatpush1.msra.mxu0 0.0
        %312 = vmatprep.subr.mxu0 0.0
        %313 = vmatpush1.msra.mxu0 0.0
        %314 = vmatprep.subr.mxu0 0.0
        %315 = vmatpush1.msra.mxu0 0.0
        %316 = vmatprep.subr.mxu0 0.0
        %317 = vmatpush1.msra.mxu0 0.0
        %318 = vmatprep.subr.mxu0 0.0
        %319 = vmatpush1.msra.mxu0 0.0
        %320 = vmatprep.subr.mxu0 0.0
        %321 = vmatpush1.msra.mxu0 0.0
        %322 = vmatprep.subr.mxu0 0.0
        %323 = vmatpush1.msra.mxu0 0.0
        %324 = vmatprep.mubr.f32.mxu0 0.0
        %325 = vmatmul.mubr.f32.gmra.mrb[0].mxu0 %v253
        %v326 = vpop.f32.mrb[0].mxu0
        %v327 = vadd.f32 %v247, %v326
        %v328 = vpop.f32.mrb[0].mxu0
        %v329 = vadd.f32 %v247, %v328
        %330 = vdwg.mxu0
        %v331 = vlaneseq
        %v332 = vshrl.u32 %v331, 7
        %v333 = vsub.s32 2, %v332
        %v334 = vrot.slane %v327, %v333
        %v335 = vlaneseq
        %v336 = vshrl.u32 %v335, 7
        %v337 = vsub.s32 2, %v336
        %v338 = vrot.slane %v329, %v337
        %v339 = vmul.f32 %v327, %v334
        %v340 = vmul.f32 %v329, %v338
        %vm341 = vcmask 1041408
        %v342 = vsel %vm341, %v339, 0.0
        %v343 = vsel %vm341, %v340, 0.0
        %v344 = vadd.f32 %v342, %v343
        %345 = vadd.xlane.f32.xlu0 %v344
        %v346 = vpop.xlane.xlu0 %345
        %v347 = vrcp.pop %v327
        %v348 = vrcp.pop %v329
        %v349 = vmul.f32 %v334, %v346
        %v350 = vmul.f32 %v338, %v346
        %v351 = vmul.f32 %v349, %v347
        %v352 = vmul.f32 %v350, %v348
        %v353 = vld [vmem:[%s3] sm:$0xf]
        %v354 = vlaneseq
        %v355 = vshrl.u32 %v354, 7
        %v356 = vadd.s32 %v355, 8
        %v357 = vadd.s32 %v355, 16
        %v358 = vadd.s32 %v355, 24
        %v359 = vadd.s32 %v355, 32
        %v360 = vadd.s32 %v355, 40
        %v361 = vadd.s32 %v355, 48
        %v362 = vadd.s32 %v355, 56
        %v363 = vadd.s32 %v355, 64
        %v364 = vadd.s32 %v355, 72
        %v365 = vadd.s32 %v355, 80
        %v366 = vadd.s32 %v355, 88
        %v367 = vadd.s32 %v355, 96
        %v368 = vadd.s32 %v355, 104
        %v369 = vadd.s32 %v355, 112
        %v370 = vadd.s32 %v355, 120
        %v371 = vlaneseq
        %v372 = vand.u32 %v371, 127
        %v373 = vadd.s32 %v372, 128
        %v374 = vmul.u32 %v355, 2
        %v375 = vmul.u32 %v356, 2
        %v376 = vmul.u32 %v357, 2
        %v377 = vmul.u32 %v358, 2
        %v378 = vmul.u32 %v359, 2
        %v379 = vmul.u32 %v360, 2
        %v380 = vmul.u32 %v361, 2
        %v381 = vmul.u32 %v362, 2
        %v382 = vmul.u32 %v363, 2
        %v383 = vmul.u32 %v364, 2
        %v384 = vmul.u32 %v365, 2
        %v385 = vmul.u32 %v366, 2
        %v386 = vmul.u32 %v367, 2
        %v387 = vmul.u32 %v368, 2
        %v388 = vmul.u32 %v369, 2
        %v389 = vmul.u32 %v370, 2
        %v390 = vld [vmem:[%s4] sm:$0xf]
        %392 = vset.pattern.permute.xlu0 0
        %393 = vperm.xlu0 %392, %v390
        %v394 = vpop.permute.xlu0 %393
        %v396 = vunpack.c.l.s4 839922192
        %v397 = vunpack.c.0.s8 %v396
        %v398 = vlaneseq
        %v399 = vshrl.u32 %v398, 7
        %v400 = vsub.s32 %v397, %v399
        %v401 = vrot.slane %v394, %v400
        %v403 = vadd.f32 %v241, %v401
        %405 = vset.pattern.permute.xlu0 0
        %406 = vperm.xlu0 %405, %v353
        %v407 = vpop.permute.xlu0 %406
        %v409 = vlaneseq
        %v410 = vshrl.u32 %v409, 7
        %v411 = vsub.s32 0, %v410
        %v412 = vrot.slane %v351, %v411
        %v413 = vmul.f32 %v407, %v412
        %414 = vset.pattern.permute.xlu0 1
        %415 = vperm.xlu0 %414, %v353
        %v416 = vpop.permute.xlu0 %415
        %v418 = vlaneseq
        %v419 = vshrl.u32 %v418, 7
        %v420 = vsub.s32 0, %v419
        %v421 = vrot.slane %v352, %v420
        %v422 = vmul.f32 %v416, %v421
        %v423 = vadd.f32 %v413, %v422
        %vm424 = vcmp.eq.s32.totalorder %v372, %v374
        %vm425 = vcmp.eq.s32.totalorder %v373, %v374
        %vm426 = vcmp.eq.s32.totalorder %v372, %v375
        %vm427 = vcmp.eq.s32.totalorder %v373, %v375
        %vm428 = vcmp.eq.s32.totalorder %v372, %v376
        %vm429 = vcmp.eq.s32.totalorder %v373, %v376
        %vm430 = vcmp.eq.s32.totalorder %v372, %v377
        %vm431 = vcmp.eq.s32.totalorder %v373, %v377
        %vm432 = vcmp.eq.s32.totalorder %v372, %v378
        %vm433 = vcmp.eq.s32.totalorder %v373, %v378
        %vm434 = vcmp.eq.s32.totalorder %v372, %v379
        %vm435 = vcmp.eq.s32.totalorder %v373, %v379
        %vm436 = vcmp.eq.s32.totalorder %v372, %v380
        %vm437 = vcmp.eq.s32.totalorder %v373, %v380
        %vm438 = vcmp.eq.s32.totalorder %v372, %v381
        %vm439 = vcmp.eq.s32.totalorder %v373, %v381
        %vm440 = vcmp.eq.s32.totalorder %v372, %v382
        %vm441 = vcmp.eq.s32.totalorder %v373, %v382
        %vm442 = vcmp.eq.s32.totalorder %v372, %v383
        %vm443 = vcmp.eq.s32.totalorder %v373, %v383
        %vm444 = vcmp.eq.s32.totalorder %v372, %v384
        %vm445 = vcmp.eq.s32.totalorder %v373, %v384
        %vm446 = vcmp.eq.s32.totalorder %v372, %v385
        %vm447 = vcmp.eq.s32.totalorder %v373, %v385
        %vm448 = vcmp.eq.s32.totalorder %v372, %v386
        %vm449 = vcmp.eq.s32.totalorder %v373, %v386
        %vm450 = vcmp.eq.s32.totalorder %v372, %v387
        %vm451 = vcmp.eq.s32.totalorder %v373, %v387
        %vm452 = vcmp.eq.s32.totalorder %v372, %v388
        %vm453 = vcmp.eq.s32.totalorder %v373, %v388
        %vm454 = vcmp.eq.s32.totalorder %v372, %v389
        %vm455 = vcmp.eq.s32.totalorder %v373, %v389
        %v456 = vsel %vm424, 1, 0
        %v457 = vsel %vm425, 1, 0
        %v458 = vsel %vm426, 1, 0
        %v459 = vsel %vm427, 1, 0
        %v460 = vsel %vm428, 1, 0
        %v461 = vsel %vm429, 1, 0
        %v462 = vsel %vm430, 1, 0
        %v463 = vsel %vm431, 1, 0
        %v464 = vsel %vm432, 1, 0
        %v465 = vsel %vm433, 1, 0
        %v466 = vsel %vm434, 1, 0
        %v467 = vsel %vm435, 1, 0
        %v468 = vsel %vm436, 1, 0
        %v469 = vsel %vm437, 1, 0
        %v470 = vsel %vm438, 1, 0
        %v471 = vsel %vm439, 1, 0
        %v472 = vsel %vm440, 1, 0
        %v473 = vsel %vm441, 1, 0
        %v474 = vsel %vm442, 1, 0
        %v475 = vsel %vm443, 1, 0
        %v476 = vsel %vm444, 1, 0
        %v477 = vsel %vm445, 1, 0
        %v478 = vsel %vm446, 1, 0
        %v479 = vsel %vm447, 1, 0
        %v480 = vsel %vm448, 1, 0
        %v481 = vsel %vm449, 1, 0
        %v482 = vsel %vm450, 1, 0
        %v483 = vsel %vm451, 1, 0
        %v484 = vsel %vm452, 1, 0
        %v485 = vsel %vm453, 1, 0
        %v486 = vsel %vm454, 1, 0
        %v487 = vsel %vm455, 1, 0
        %v488 = vcvt.s32.f32 %v456
        %v489 = vcvt.s32.f32 %v457
        %v490 = vcvt.s32.f32 %v458
        %v491 = vcvt.s32.f32 %v459
        %v492 = vcvt.s32.f32 %v460
        %v493 = vcvt.s32.f32 %v461
        %v494 = vcvt.s32.f32 %v462
        %v495 = vcvt.s32.f32 %v463
        %v496 = vcvt.s32.f32 %v464
        %v497 = vcvt.s32.f32 %v465
        %v498 = vcvt.s32.f32 %v466
        %v499 = vcvt.s32.f32 %v467
        %v500 = vcvt.s32.f32 %v468
        %v501 = vcvt.s32.f32 %v469
        %v502 = vcvt.s32.f32 %v470
        %v503 = vcvt.s32.f32 %v471
        %v504 = vcvt.s32.f32 %v472
        %v505 = vcvt.s32.f32 %v473
        %v506 = vcvt.s32.f32 %v474
        %v507 = vcvt.s32.f32 %v475
        %v508 = vcvt.s32.f32 %v476
        %v509 = vcvt.s32.f32 %v477
        %v510 = vcvt.s32.f32 %v478
        %v511 = vcvt.s32.f32 %v479
        %v512 = vcvt.s32.f32 %v480
        %v513 = vcvt.s32.f32 %v481
        %v514 = vcvt.s32.f32 %v482
        %v515 = vcvt.s32.f32 %v483
        %v516 = vcvt.s32.f32 %v484
        %v517 = vcvt.s32.f32 %v485
        %v518 = vcvt.s32.f32 %v486
        %v519 = vcvt.s32.f32 %v487
        %520 = vmatprep.subr.mxu0 %v489
        %521 = vmatpush1.msra.mxu0 %v488
        %522 = vmatprep.subr.mxu0 %v491
        %523 = vmatpush1.msra.mxu0 %v490
        %524 = vmatprep.subr.mxu0 %v493
        %525 = vmatpush1.msra.mxu0 %v492
        %526 = vmatprep.subr.mxu0 %v495
        %527 = vmatpush1.msra.mxu0 %v494
        %528 = vmatprep.subr.mxu0 %v497
        %529 = vmatpush1.msra.mxu0 %v496
        %530 = vmatprep.subr.mxu0 %v499
        %531 = vmatpush1.msra.mxu0 %v498
        %532 = vmatprep.subr.mxu0 %v501
        %533 = vmatpush1.msra.mxu0 %v500
        %534 = vmatprep.subr.mxu0 %v503
        %535 = vmatpush1.msra.mxu0 %v502
        %536 = vmatprep.subr.mxu0 %v505
        %537 = vmatpush1.msra.mxu0 %v504
        %538 = vmatprep.subr.mxu0 %v507
        %539 = vmatpush1.msra.mxu0 %v506
        %540 = vmatprep.subr.mxu0 %v509
        %541 = vmatpush1.msra.mxu0 %v508
        %542 = vmatprep.subr.mxu0 %v511
        %543 = vmatpush1.msra.mxu0 %v510
        %544 = vmatprep.subr.mxu0 %v513
        %545 = vmatpush1.msra.mxu0 %v512
        %546 = vmatprep.subr.mxu0 %v515
        %547 = vmatpush1.msra.mxu0 %v514
        %548 = vmatprep.subr.mxu0 %v517
        %549 = vmatpush1.msra.mxu0 %v516
        %550 = vmatprep.subr.mxu0 %v519
        %551 = vmatpush1.msra.mxu0 %v518
        %552 = vmatprep.subr.mxu0 0.0
        %553 = vmatpush1.msra.mxu0 0.0
        %554 = vmatprep.subr.mxu0 0.0
        %555 = vmatpush1.msra.mxu0 0.0
        %556 = vmatprep.subr.mxu0 0.0
        %557 = vmatpush1.msra.mxu0 0.0
        %558 = vmatprep.subr.mxu0 0.0
        %559 = vmatpush1.msra.mxu0 0.0
        %560 = vmatprep.subr.mxu0 0.0
        %561 = vmatpush1.msra.mxu0 0.0
        %562 = vmatprep.subr.mxu0 0.0
        %563 = vmatpush1.msra.mxu0 0.0
        %564 = vmatprep.subr.mxu0 0.0
        %565 = vmatpush1.msra.mxu0 0.0
        %566 = vmatprep.subr.mxu0 0.0
        %567 = vmatpush1.msra.mxu0 0.0
        %568 = vmatprep.subr.mxu0 0.0
        %569 = vmatpush1.msra.mxu0 0.0
        %570 = vmatprep.subr.mxu0 0.0
        %571 = vmatpush1.msra.mxu0 0.0
        %572 = vmatprep.subr.mxu0 0.0
        %573 = vmatpush1.msra.mxu0 0.0
        %574 = vmatprep.subr.mxu0 0.0
        %575 = vmatpush1.msra.mxu0 0.0
        %576 = vmatprep.subr.mxu0 0.0
        %577 = vmatpush1.msra.mxu0 0.0
        %578 = vmatprep.subr.mxu0 0.0
        %579 = vmatpush1.msra.mxu0 0.0
        %580 = vmatprep.subr.mxu0 0.0
        %581 = vmatpush1.msra.mxu0 0.0
        %582 = vmatprep.subr.mxu0 0.0
        %583 = vmatpush1.msra.mxu0 0.0
        %584 = vmatprep.mubr.f32.mxu0 0.0
        %585 = vmatmul.mubr.f32.gmra.mrb[0].mxu0 %v423
        %v586 = vpop.f32.mrb[0].mxu0
        %v587 = vadd.f32 0.0, %v586
        %v588 = vpop.f32.mrb[0].mxu0
        %v589 = vadd.f32 0.0, %v588
        %590 = vdwg.mxu0
        %v593 = vcombine.low %v587, %v589
        %v595 = vadd.f32 %v403, %v593
        %v596 = vlaneseq
        %v597 = vshrl.u32 %v596, 7
        %v598 = vsub.s32 1, %v597
        %v599 = vrot.slane %v351, %v598
        %v600 = vmul.f32 %v407, %v599
        %v601 = vlaneseq
        %v602 = vshrl.u32 %v601, 7
        %v603 = vsub.s32 1, %v602
        %v604 = vrot.slane %v352, %v603
        %v605 = vmul.f32 %v416, %v604
        %v606 = vadd.f32 %v600, %v605
        %v607 = vadd.s32 %v374, 1
        %v608 = vadd.s32 %v375, 1
        %v609 = vadd.s32 %v376, 1
        %v610 = vadd.s32 %v377, 1
        %v611 = vadd.s32 %v378, 1
        %v612 = vadd.s32 %v379, 1
        %v613 = vadd.s32 %v380, 1
        %v614 = vadd.s32 %v381, 1
        %v615 = vadd.s32 %v382, 1
        %v616 = vadd.s32 %v383, 1
        %v617 = vadd.s32 %v384, 1
        %v618 = vadd.s32 %v385, 1
        %v619 = vadd.s32 %v386, 1
        %v620 = vadd.s32 %v387, 1
        %v621 = vadd.s32 %v388, 1
        %v622 = vadd.s32 %v389, 1
        %vm623 = vcmp.eq.s32.totalorder %v372, %v607
        %vm624 = vcmp.eq.s32.totalorder %v373, %v607
        %vm625 = vcmp.eq.s32.totalorder %v372, %v608
        %vm626 = vcmp.eq.s32.totalorder %v373, %v608
        %vm627 = vcmp.eq.s32.totalorder %v372, %v609
        %vm628 = vcmp.eq.s32.totalorder %v373, %v609
        %vm629 = vcmp.eq.s32.totalorder %v372, %v610
        %vm630 = vcmp.eq.s32.totalorder %v373, %v610
        %vm631 = vcmp.eq.s32.totalorder %v372, %v611
        %vm632 = vcmp.eq.s32.totalorder %v373, %v611
        %vm633 = vcmp.eq.s32.totalorder %v372, %v612
        %vm634 = vcmp.eq.s32.totalorder %v373, %v612
        %vm635 = vcmp.eq.s32.totalorder %v372, %v613
        %vm636 = vcmp.eq.s32.totalorder %v373, %v613
        %vm637 = vcmp.eq.s32.totalorder %v372, %v614
        %vm638 = vcmp.eq.s32.totalorder %v373, %v614
        %vm639 = vcmp.eq.s32.totalorder %v372, %v615
        %vm640 = vcmp.eq.s32.totalorder %v373, %v615
        %vm641 = vcmp.eq.s32.totalorder %v372, %v616
        %vm642 = vcmp.eq.s32.totalorder %v373, %v616
        %vm643 = vcmp.eq.s32.totalorder %v372, %v617
        %vm644 = vcmp.eq.s32.totalorder %v373, %v617
        %vm645 = vcmp.eq.s32.totalorder %v372, %v618
        %vm646 = vcmp.eq.s32.totalorder %v373, %v618
        %vm647 = vcmp.eq.s32.totalorder %v372, %v619
        %vm648 = vcmp.eq.s32.totalorder %v373, %v619
        %vm649 = vcmp.eq.s32.totalorder %v372, %v620
        %vm650 = vcmp.eq.s32.totalorder %v373, %v620
        %vm651 = vcmp.eq.s32.totalorder %v372, %v621
        %vm652 = vcmp.eq.s32.totalorder %v373, %v621
        %vm653 = vcmp.eq.s32.totalorder %v372, %v622
        %vm654 = vcmp.eq.s32.totalorder %v373, %v622
        %v655 = vsel %vm623, 1, 0
        %v656 = vsel %vm624, 1, 0
        %v657 = vsel %vm625, 1, 0
        %v658 = vsel %vm626, 1, 0
        %v659 = vsel %vm627, 1, 0
        %v660 = vsel %vm628, 1, 0
        %v661 = vsel %vm629, 1, 0
        %v662 = vsel %vm630, 1, 0
        %v663 = vsel %vm631, 1, 0
        %v664 = vsel %vm632, 1, 0
        %v665 = vsel %vm633, 1, 0
        %v666 = vsel %vm634, 1, 0
        %v667 = vsel %vm635, 1, 0
        %v668 = vsel %vm636, 1, 0
        %v669 = vsel %vm637, 1, 0
        %v670 = vsel %vm638, 1, 0
        %v671 = vsel %vm639, 1, 0
        %v672 = vsel %vm640, 1, 0
        %v673 = vsel %vm641, 1, 0
        %v674 = vsel %vm642, 1, 0
        %v675 = vsel %vm643, 1, 0
        %v676 = vsel %vm644, 1, 0
        %v677 = vsel %vm645, 1, 0
        %v678 = vsel %vm646, 1, 0
        %v679 = vsel %vm647, 1, 0
        %v680 = vsel %vm648, 1, 0
        %v681 = vsel %vm649, 1, 0
        %v682 = vsel %vm650, 1, 0
        %v683 = vsel %vm651, 1, 0
        %v684 = vsel %vm652, 1, 0
        %v685 = vsel %vm653, 1, 0
        %v686 = vsel %vm654, 1, 0
        %v687 = vcvt.s32.f32 %v655
        %v688 = vcvt.s32.f32 %v656
        %v689 = vcvt.s32.f32 %v657
        %v690 = vcvt.s32.f32 %v658
        %v691 = vcvt.s32.f32 %v659
        %v692 = vcvt.s32.f32 %v660
        %v693 = vcvt.s32.f32 %v661
        %v694 = vcvt.s32.f32 %v662
        %v695 = vcvt.s32.f32 %v663
        %v696 = vcvt.s32.f32 %v664
        %v697 = vcvt.s32.f32 %v665
        %v698 = vcvt.s32.f32 %v666
        %v699 = vcvt.s32.f32 %v667
        %v700 = vcvt.s32.f32 %v668
        %v701 = vcvt.s32.f32 %v669
        %v702 = vcvt.s32.f32 %v670
        %v703 = vcvt.s32.f32 %v671
        %v704 = vcvt.s32.f32 %v672
        %v705 = vcvt.s32.f32 %v673
        %v706 = vcvt.s32.f32 %v674
        %v707 = vcvt.s32.f32 %v675
        %v708 = vcvt.s32.f32 %v676
        %v709 = vcvt.s32.f32 %v677
        %v710 = vcvt.s32.f32 %v678
        %v711 = vcvt.s32.f32 %v679
        %v712 = vcvt.s32.f32 %v680
        %v713 = vcvt.s32.f32 %v681
        %v714 = vcvt.s32.f32 %v682
        %v715 = vcvt.s32.f32 %v683
        %v716 = vcvt.s32.f32 %v684
        %v717 = vcvt.s32.f32 %v685
        %v718 = vcvt.s32.f32 %v686
        %719 = vmatprep.subr.mxu0 %v688
        %720 = vmatpush1.msra.mxu0 %v687
        %721 = vmatprep.subr.mxu0 %v690
        %722 = vmatpush1.msra.mxu0 %v689
        %723 = vmatprep.subr.mxu0 %v692
        %724 = vmatpush1.msra.mxu0 %v691
        %725 = vmatprep.subr.mxu0 %v694
        %726 = vmatpush1.msra.mxu0 %v693
        %727 = vmatprep.subr.mxu0 %v696
        %728 = vmatpush1.msra.mxu0 %v695
        %729 = vmatprep.subr.mxu0 %v698
        %730 = vmatpush1.msra.mxu0 %v697
        %731 = vmatprep.subr.mxu0 %v700
        %732 = vmatpush1.msra.mxu0 %v699
        %733 = vmatprep.subr.mxu0 %v702
        %734 = vmatpush1.msra.mxu0 %v701
        %735 = vmatprep.subr.mxu0 %v704
        %736 = vmatpush1.msra.mxu0 %v703
        %737 = vmatprep.subr.mxu0 %v706
        %738 = vmatpush1.msra.mxu0 %v705
        %739 = vmatprep.subr.mxu0 %v708
        %740 = vmatpush1.msra.mxu0 %v707
        %741 = vmatprep.subr.mxu0 %v710
        %742 = vmatpush1.msra.mxu0 %v709
        %743 = vmatprep.subr.mxu0 %v712
        %744 = vmatpush1.msra.mxu0 %v711
        %745 = vmatprep.subr.mxu0 %v714
        %746 = vmatpush1.msra.mxu0 %v713
        %747 = vmatprep.subr.mxu0 %v716
        %748 = vmatpush1.msra.mxu0 %v715
        %749 = vmatprep.subr.mxu0 %v718
        %750 = vmatpush1.msra.mxu0 %v717
        %751 = vmatprep.subr.mxu0 0.0
        %752 = vmatpush1.msra.mxu0 0.0
        %753 = vmatprep.subr.mxu0 0.0
        %754 = vmatpush1.msra.mxu0 0.0
        %755 = vmatprep.subr.mxu0 0.0
        %756 = vmatpush1.msra.mxu0 0.0
        %757 = vmatprep.subr.mxu0 0.0
        %758 = vmatpush1.msra.mxu0 0.0
        %759 = vmatprep.subr.mxu0 0.0
        %760 = vmatpush1.msra.mxu0 0.0
        %761 = vmatprep.subr.mxu0 0.0
        %762 = vmatpush1.msra.mxu0 0.0
        %763 = vmatprep.subr.mxu0 0.0
        %764 = vmatpush1.msra.mxu0 0.0
        %765 = vmatprep.subr.mxu0 0.0
        %766 = vmatpush1.msra.mxu0 0.0
        %767 = vmatprep.subr.mxu0 0.0
        %768 = vmatpush1.msra.mxu0 0.0
        %769 = vmatprep.subr.mxu0 0.0
        %770 = vmatpush1.msra.mxu0 0.0
        %771 = vmatprep.subr.mxu0 0.0
        %772 = vmatpush1.msra.mxu0 0.0
        %773 = vmatprep.subr.mxu0 0.0
        %774 = vmatpush1.msra.mxu0 0.0
        %775 = vmatprep.subr.mxu0 0.0
        %776 = vmatpush1.msra.mxu0 0.0
        %777 = vmatprep.subr.mxu0 0.0
        %778 = vmatpush1.msra.mxu0 0.0
        %779 = vmatprep.subr.mxu0 0.0
        %780 = vmatpush1.msra.mxu0 0.0
        %781 = vmatprep.subr.mxu0 0.0
        %782 = vmatpush1.msra.mxu0 0.0
        %783 = vmatprep.mubr.f32.mxu0 0.0
        %784 = vmatmul.mubr.f32.gmra.mrb[0].mxu0 %v606
        %v785 = vpop.f32.mrb[0].mxu0
        %v786 = vadd.f32 0.0, %v785
        %v787 = vpop.f32.mrb[0].mxu0
        %v788 = vadd.f32 0.0, %v787
        %789 = vdwg.mxu0
        %v792 = vcombine.low %v786, %v788
        %v794 = vadd.f32 %v595, %v792
        %795 = vst [vmem:[%s240] sm:$0xff] %v794
        %s796 = sand.u32 %s140, 1
        %s797 = scalar_lea.sflag [#allocation4], %s796
        %s798 = sand.u32 %s140, 1
        %s799 = smul.addr %s798, 8
        %s800 = scalar_lea.vmem [#allocation5], %s799
        // Predicated region
        $region45: #{tpu_custom_call.1} parent=39 // pred_check
          %p801 = pneg %p150
        $region46: #{tpu_custom_call.1} parent=39 // pred_check_branch
          %803 = sbr.rel (%p801) target = $region48
        $region47: #{tpu_custom_call.1} parent=39 // pred_region
          %s805 = ssub.s32 128, 128
          %806 = vsyncadd %s797, %s805
          %s807 = smul.addr %s22, 2
          %s808 = smul.addr %s807, 64
          %s809 = scalar_lea.hbm %s5, %s808
          %s811 = sshll.u32 %s800, 4
          %s812 = int_to_ptr.vmem [resolvable:$true] %s811
          %814 = dma.vmem_to_hbm [thread:$0]  %s812, 128, %s809, %s797
        $region48: #{tpu_custom_call.1} parent=39 // pred_fallthru
          _
      $region40: #{tpu_custom_call.1} parent=5 // pred_fallthru
        _
      %p815 = scmp.le.s32.totalorder 2, %s17
      // Predicated region
      $region49: #{tpu_custom_call.1} parent=5 // pred_check
        %p816 = pneg %p815
      $region50: #{tpu_custom_call.1} parent=5 // pred_check_branch
        %818 = sbr.rel (%p816) target = $region52
      $region51: #{tpu_custom_call.1} parent=5 // pred_region
        %s819 = ssub.s32 %s17, 2
        // Predicated region
        $region53: #{tpu_custom_call.1} parent=51 // pred_check
          %p820 = pneg %p156
        $region54: #{tpu_custom_call.1} parent=51 // pred_check_branch
          %822 = sbr.rel (%p820) target = $region56
        $region55: #{tpu_custom_call.1} parent=51 // pred_region
          %s823 = sand.u32 %s141, 1
          %s824 = scalar_lea.sflag [#allocation4], %s823
          %s825 = sand.u32 %s141, 1
          %s826 = smul.addr %s825, 8
          %s827 = scalar_lea.vmem [#allocation5], %s826
          %828 = dma.done %s824, 128
        $region56: #{tpu_custom_call.1} parent=51 // pred_fallthru
          _
      $region52: #{tpu_custom_call.1} parent=5 // pred_fallthru
        _
    $region6: #{tpu_custom_call.1} parent=1 // loop_footer
      %s21 = sadd.s32 1, %s17
    $region7: #{tpu_custom_call.1} parent=1 // loop_footer_branch
      %16 = sbr.rel target = $region3
    $region8: #{tpu_custom_call.1} parent=1 // loop_exit
      _
    %829 = vsyncpa [#allocation3], 1
    %s830 = scalar_lea.sflag [#allocation3], 1
    %831 = vsyncpa %s830, 1
    %832 = vsyncpa [#allocation4], 1
    %s833 = scalar_lea.sflag [#allocation4], 1
    %834 = vsyncpa %s833, 1

</llo_original>
